<compile_context>
chip_gen: v5e
topology: v5e:2x2
jax: 0.10.0
libtpu: 0.0.40
codegen_flags: <defaults>
</compile_context>

<pallas_src>
import functools

import jax
import jax.numpy as jnp
from jax.experimental import pallas as pl
from jax.experimental.pallas import tpu as pltpu


def _round_up(x, m):
    return ((x + m - 1) // m) * m


# ---------------------------------------------------------------------------
# Kernels
# ---------------------------------------------------------------------------
def _conv1d_fullk_kernel(x_ref, w_ref, b_ref, o_ref):
    """Full-K path: one (tm, tn) output tile = dot over the whole nx axis."""
    acc = jnp.dot(x_ref[...], w_ref[...], preferred_element_type=jnp.float32)
    o_ref[...] = (acc + b_ref[...].astype(jnp.float32)).astype(o_ref.dtype)


def _conv1d_kgrid_kernel(x_ref, w_ref, b_ref, o_ref, acc_ref):
    """K-gridded fallback: accumulate over the K (=nx) grid axis."""
    k = pl.program_id(2)

    @pl.when(k == 0)
    def _():
        acc_ref[...] = jnp.zeros_like(acc_ref)

    acc_ref[...] += jnp.dot(
        x_ref[...], w_ref[...], preferred_element_type=jnp.float32
    )

    @pl.when(k == pl.num_programs(2) - 1)
    def _():
        o_ref[...] = (acc_ref[...] + b_ref[...].astype(jnp.float32)).astype(
            o_ref.dtype
        )


# ---------------------------------------------------------------------------
# Wrapper
# ---------------------------------------------------------------------------
_VMEM_LIMIT_BYTES = 48 * 1024 * 1024   # safe on v7x (64 MiB) and v5e/v6e (128 MiB)
_FULLK_BUDGET_BYTES = 32 * 1024 * 1024  # double-buffered working-set target


@functools.partial(
    jax.jit, static_argnames=("tm", "tn", "tk", "compute_dtype", "k_grid")
)
def conv1d(x, weight, bias, *, tm=256, tn=512, tk=512, compute_dtype=None,
           k_grid=None):
    """GPT-2 Conv1D forward: y[..., nf] = x[..., nx] @ weight[nx, nf] + bias[nf].

    compute_dtype: optional low-precision MXU input dtype (e.g. jnp.bfloat16);
                   accumulation and bias add stay in float32.
    k_grid:        None = auto (grid the K axis only if the full-K working set
                   would not fit in VMEM); True/False to force.
    """
    *lead, nx = x.shape
    nf = weight.shape[1]
    out_dtype = x.dtype

    x2d = x.reshape(-1, nx)
    m = x2d.shape[0]

    if compute_dtype is not None:
        x2d = x2d.astype(compute_dtype)
        weight = weight.astype(compute_dtype)
    in_bytes = jnp.dtype(x2d.dtype).itemsize
    out_bytes = jnp.dtype(out_dtype).itemsize

    # Effective tile sizes: auto-shrink for small problems, keep TPU layout
    # alignment (second-to-last dims multiple of 8, last dims multiple of 128).
    tm_eff = _round_up(min(tm, _round_up(m, 8)), 8)
    tn_eff = _round_up(min(tn, _round_up(nf, 128)), 128)

    m_pad = _round_up(m, tm_eff)
    nf_pad = _round_up(nf, tn_eff)

    if m_pad != m:
        x2d = jnp.pad(x2d, ((0, m_pad - m), (0, 0)))
    if nf_pad != nf:
        weight = jnp.pad(weight, ((0, 0), (0, nf_pad - nf)))
        bias = jnp.pad(bias, (0, nf_pad - nf))
    bias2d = bias.reshape(1, nf_pad)

    cost = pl.CostEstimate(
        flops=2 * m * nx * nf,
        transcendentals=0,
        bytes_accessed=in_bytes * (m * nx + nx * nf) + out_bytes * m * nf,
    )

    if k_grid is None:
        # Double-buffered inputs + output for the full-K kernel.
        fullk_bytes = (
            2 * (tm_eff * nx + nx * tn_eff) * in_bytes
            + 2 * tm_eff * tn_eff * out_bytes
        )
        use_full_k = fullk_bytes <= _FULLK_BUDGET_BYTES
    else:
        use_full_k = not k_grid

    if use_full_k:
        # No K reduction axis: one dot per output tile, weight streamed once
        # per N-tile regardless of how many M-tiles there are.
        grid = (m_pad // tm_eff, nf_pad // tn_eff)
        out2d = pl.pallas_call(
            _conv1d_fullk_kernel,
            out_shape=jax.ShapeDtypeStruct((m_pad, nf_pad), out_dtype),
            grid_spec=pltpu.PrefetchScalarGridSpec(
                num_scalar_prefetch=0,
                grid=grid,
                in_specs=[
                    pl.BlockSpec((tm_eff, nx), lambda i, j: (i, 0)),   # x
                    pl.BlockSpec((nx, tn_eff), lambda i, j: (0, j)),   # weight
                    pl.BlockSpec((1, tn_eff), lambda i, j: (0, j)),    # bias
                ],
                out_specs=pl.BlockSpec((tm_eff, tn_eff), lambda i, j: (i, j)),
            ),
            compiler_params=pltpu.CompilerParams(
                dimension_semantics=("parallel", "parallel"),
                vmem_limit_bytes=_VMEM_LIMIT_BYTES,
            ),
            cost_estimate=cost,
        )(x2d, weight, bias2d)
    else:
        # K-gridded fallback for very large nx*nf (weight panel too big for VMEM).
        tk_eff = min(_round_up(tk, 128), _round_up(nx, 128))
        nx_pad = _round_up(nx, tk_eff)
        if nx_pad != nx:
            x2d = jnp.pad(x2d, ((0, 0), (0, nx_pad - nx)))
            weight = jnp.pad(weight, ((0, nx_pad - nx), (0, 0)))

        grid = (m_pad // tm_eff, nf_pad // tn_eff, nx_pad // tk_eff)
        out2d = pl.pallas_call(
            _conv1d_kgrid_kernel,
            out_shape=jax.ShapeDtypeStruct((m_pad, nf_pad), out_dtype),
            grid_spec=pltpu.PrefetchScalarGridSpec(
                num_scalar_prefetch=0,
                grid=grid,
                in_specs=[
                    pl.BlockSpec((tm_eff, tk_eff), lambda i, j, k: (i, k)),  # x
                    pl.BlockSpec((tk_eff, tn_eff), lambda i, j, k: (k, j)),  # w
                    pl.BlockSpec((1, tn_eff), lambda i, j, k: (0, j)),       # b
                ],
                out_specs=pl.BlockSpec((tm_eff, tn_eff), lambda i, j, k: (i, j)),
                scratch_shapes=[pltpu.VMEM((tm_eff, tn_eff), jnp.float32)],
            ),
            compiler_params=pltpu.CompilerParams(
                dimension_semantics=("parallel", "parallel", "arbitrary"),
                vmem_limit_bytes=_VMEM_LIMIT_BYTES,
            ),
            cost_estimate=cost,
        )(x2d, weight, bias2d)

    out2d = out2d[:m, :nf]
    return out2d.reshape(*lead, nf)


# ---------------------------------------------------------------------------
# Self-test
# ---------------------------------------------------------------------------
if __name__ == "__main__":
    # Module config (deterministic, synthetic): nx=128 input features, nf=256 output.
    batch, seq, nx, nf = 2, 8, 128, 256

    key = jax.random.PRNGKey(0)
    kx, kw, kx2, kw2 = jax.random.split(key, 4)

    # Parameters as in Conv1D.__init__: weight ~ N(0, 0.02), bias = zeros.
    weight = 0.02 * jax.random.normal(kw, (nx, nf), dtype=jnp.float32)
    bias = jnp.zeros((nf,), dtype=jnp.float32)
    x = jax.random.normal(kx, (batch, seq, nx), dtype=jnp.float32)

    # f32 path (full-K kernel at this size).
    y = conv1d(x, weight, bias)
    jax.block_until_ready(y)
    y_ref = (x.reshape(-1, nx) @ weight + bias).reshape(batch, seq, nf)
    assert y.shape == (batch, seq, nf)
    assert jnp.allclose(y, y_ref, atol=1e-4, rtol=1e-4)

    # bf16-input fast path (f32 accumulation inside the kernel).
    y_bf16 = conv1d(x, weight, bias, compute_dtype=jnp.bfloat16)
    jax.block_until_ready(y_bf16)
    assert jnp.allclose(y_bf16, y_ref, atol=3e-2, rtol=3e-2)

    # Non-tile-aligned shapes + forced K-gridded fallback path.
    nx2, nf2 = 256, 384
    weight2 = 0.02 * jax.random.normal(kw2, (nx2, nf2), dtype=jnp.float32)
    bias2 = 0.01 * jnp.ones((nf2,), dtype=jnp.float32)
    x2 = jax.random.normal(kx2, (3, 5, nx2), dtype=jnp.float32)   # M=15, not /8
    y2 = conv1d(x2, weight2, bias2, tk=128, k_grid=True)
    jax.block_until_ready(y2)
    y2_ref = (x2.reshape(-1, nx2) @ weight2 + bias2).reshape(3, 5, nf2)
    assert jnp.allclose(y2, y2_ref, atol=1e-4, rtol=1e-4)

    print("KERNEL_OK")
</pallas_src>

<mosaic_0001>
module attributes {stable_mosaic.version = 11 : i64} {
  func.func @_conv1d_fullk_kernel(%arg0: i32, %arg1: i32, %arg2: memref<16x128xf32, #tpu.memory_space<vmem>>, %arg3: memref<128x256xf32, #tpu.memory_space<vmem>>, %arg4: memref<1x256xf32, #tpu.memory_space<vmem>>, %arg5: memref<16x256xf32, #tpu.memory_space<vmem>>) attributes {dimension_semantics = [#tpu.dimension_semantics<parallel>, #tpu.dimension_semantics<parallel>], iteration_bounds = array<i64: 1, 1>, scalar_prefetch = 0 : i64, scratch_operands = 0 : i64, tpu.core_type = #tpu.core_type<tc>, window_params = [{transform_indices = @transform_0, window_bounds = array<i64: 16, 128>}, {transform_indices = @transform_1, window_bounds = array<i64: 128, 256>}, {transform_indices = @transform_2, window_bounds = array<i64: 1, 256>}, {transform_indices = @transform_3, window_bounds = array<i64: 16, 256>}]} {
    %c0 = arith.constant 0 : index
    %c0_0 = arith.constant 0 : index
    %0 = vector.load %arg2[%c0, %c0_0] : memref<16x128xf32, #tpu.memory_space<vmem>>, vector<16x128xf32>
    %c0_1 = arith.constant 0 : index
    %c0_2 = arith.constant 0 : index
    %1 = vector.load %arg3[%c0_1, %c0_2] : memref<128x256xf32, #tpu.memory_space<vmem>>, vector<128x256xf32>
    %cst = arith.constant dense<0.000000e+00> : vector<16x256xf32>
    %2 = tpu.matmul %0, %1, %cst {dimension_numbers = #tpu.dot_dimension_numbers<[1], [0], [0], [1], [0, 0, 1, 1], [], []>} : vector<16x128xf32>, vector<128x256xf32>, vector<16x256xf32> -> vector<16x256xf32>
    %c0_3 = arith.constant 0 : index
    %c0_4 = arith.constant 0 : index
    %3 = vector.load %arg4[%c0_3, %c0_4] : memref<1x256xf32, #tpu.memory_space<vmem>>, vector<1x256xf32>
    %4 = vector.broadcast %3 : vector<1x256xf32> to vector<16x256xf32>
    %5 = arith.addf %2, %4 : vector<16x256xf32>
    %c0_5 = arith.constant 0 : index
    %c0_6 = arith.constant 0 : index
    %6 = vector.load %arg5[%c0_5, %c0_6] : memref<16x256xf32, #tpu.memory_space<vmem>>, vector<16x256xf32>
    tpu.vector_store %arg5[%c0_5, %c0_6], %5 {strides = array<i32>} : memref<16x256xf32, #tpu.memory_space<vmem>>, vector<16x256xf32>,
    return
  }
  func.func @transform_0(%arg0: i32, %arg1: i32) -> (i32, i32) {
    %c0_i32 = arith.constant 0 : i32
    %c0_i32_0 = arith.constant 0 : i32
    return %arg0, %c0_i32 : i32, i32
  }
  func.func @transform_1(%arg0: i32, %arg1: i32) -> (i32, i32) {
    %c0_i32 = arith.constant 0 : i32
    %c0_i32_0 = arith.constant 0 : i32
    return %c0_i32, %arg1 : i32, i32
  }
  func.func @transform_2(%arg0: i32, %arg1: i32) -> (i32, i32) {
    %c0_i32 = arith.constant 0 : i32
    %c0_i32_0 = arith.constant 0 : i32
    return %c0_i32, %arg1 : i32, i32
  }
  func.func @transform_3(%arg0: i32, %arg1: i32) -> (i32, i32) {
    %c0_i32 = arith.constant 0 : i32
    return %arg0, %arg1 : i32, i32
  }
}

</mosaic_0001>

<llo_original>
// kernel: conv1d.1
$region0: #{conv1d.1}
  #allocation0 [shape = 'u32[]', space=smem, size = 0x4, offset = 0x4, fixed_abs, tag = 'smem constant byte address 0x4 - core index']
  #allocation1 [shape = 'u32[72,128]{1,0:T(1,128)}', space=vmem, size = 0x9000, scoped, tag = 'internal scratch']
  %s0 = inlined_call_operand.hbm [shape: f32[16,128], index: 0, kind: input, shape index: {}]
  %s1 = inlined_call_operand.hbm [shape: f32[128,256], index: 1, kind: input, shape index: {}]
  %s2 = inlined_call_operand.vmem [shape: f32[1,256], index: 2, kind: input, shape index: {}]
  %s3 = inlined_call_operand.hbm [shape: f32[16,256], index: 3, kind: output, shape index: {}]
  %s4 = sld [smem:[#allocation0]]
  $region30: #{conv1d.1} parent=0
    _
  %s6 = ssub.s32 1, %s4
  %s7 = scalar_select 0, %s6, %s4
  $region1: #{conv1d.1} parent=0
    #allocation2 [shape = 'u8[8192]{0}', space=vmem, size = 0x2000, scoped, tag = 'input window, operand 0, single buffered']
    #allocation3 [shape = 's32[1]{0}', space=sflag, size = 0x4, scoped, tag = 'scoped memory for conv1d.1']
    #allocation4 [shape = 's32[1]{0}', space=sflag, size = 0x4, scoped, tag = 'scoped memory for conv1d.1']
    #allocation5 [shape = 'u8[131072]{0}', space=vmem, size = 0x20000, scoped, tag = 'input window, operand 1, single buffered']
    #allocation6 [shape = 's32[1]{0}', space=sflag, size = 0x4, scoped, tag = 'scoped memory for conv1d.1']
    #allocation7 [shape = 'u8[16384]{0}', space=vmem, size = 0x4000, scoped, tag = 'output window, operand 0, single buffered']
    %8 = vsyncpa [#allocation3], 0
    %9 = vsyncpa [#allocation6], 0
    %10 = vsyncpa [#allocation4], 0
    // Predicated region
    $region2: #{conv1d.1} parent=1 // pred_check
      _
    $region3: #{conv1d.1} parent=1 // pred_check_branch
      %12 = sbr.rel (0) target = $region5
    $region4: #{conv1d.1} parent=1 // pred_region
      %14 = vsyncadd [#allocation3], 0
      %s15 = sshll.u32 %s0, 4
      %s16 = int_to_ptr.hbm [resolvable:$true] %s15
      %s17 = sshll.u32 [#allocation2], 4
      %s18 = int_to_ptr.vmem [resolvable:$true] %s17
      %23 = dma.hbm_to_vmem [thread:$0]  %s16, 256, %s18, [#allocation3], 128, 128, 8
    $region5: #{conv1d.1} parent=1 // pred_fallthru
      _
    // Predicated region
    $region6: #{conv1d.1} parent=1 // pred_check
      _
    $region7: #{conv1d.1} parent=1 // pred_check_branch
      %25 = sbr.rel (0) target = $region9
    $region8: #{conv1d.1} parent=1 // pred_region
      %27 = vsyncadd [#allocation6], 0
      %s28 = sshll.u32 %s1, 4
      %s29 = int_to_ptr.hbm [resolvable:$true] %s28
      %s30 = sshll.u32 [#allocation5], 4
      %s31 = int_to_ptr.vmem [resolvable:$true] %s30
      %36 = dma.hbm_to_vmem [thread:$0]  %s29, 4096, %s31, [#allocation6], 256, 256, 16
    $region9: #{conv1d.1} parent=1 // pred_fallthru
      _
    // Predicated region
    $region10: #{conv1d.1} parent=1 // pred_check
      _
    $region11: #{conv1d.1} parent=1 // pred_check_branch
      %38 = sbr.rel (0) target = $region13
    $region12: #{conv1d.1} parent=1 // pred_region
      _
    $region13: #{conv1d.1} parent=1 // pred_fallthru
      _
    // Predicated region
    $region14: #{conv1d.1} parent=1 // pred_check
      _
    $region15: #{conv1d.1} parent=1 // pred_check_branch
      %40 = sbr.rel (0) target = $region17
    $region16: #{conv1d.1} parent=1 // pred_region
      %42 = dma.done [#allocation3], 256
    $region17: #{conv1d.1} parent=1 // pred_fallthru
      _
    // Predicated region
    $region18: #{conv1d.1} parent=1 // pred_check
      _
    $region19: #{conv1d.1} parent=1 // pred_check_branch
      %44 = sbr.rel (0) target = $region21
    $region20: #{conv1d.1} parent=1 // pred_region
      %46 = dma.done [#allocation6], 4096
    $region21: #{conv1d.1} parent=1 // pred_fallthru
      _
    %v47 = vld [vmem:[#allocation2] sm:$0xff]
    %v48 = vld [vmem:[#allocation2 + $0x8] sm:$0xff]
    %v49 = vld [vmem:[#allocation5] sm:$0xff]
    %v50 = vld [vmem:[#allocation5 + $0x8] sm:$0xff]
    %v51 = vld [vmem:[#allocation5 + $0x10] sm:$0xff]
    %v52 = vld [vmem:[#allocation5 + $0x18] sm:$0xff]
    %v53 = vld [vmem:[#allocation5 + $0x20] sm:$0xff]
    %v54 = vld [vmem:[#allocation5 + $0x28] sm:$0xff]
    %v55 = vld [vmem:[#allocation5 + $0x30] sm:$0xff]
    %v56 = vld [vmem:[#allocation5 + $0x38] sm:$0xff]
    %v57 = vld [vmem:[#allocation5 + $0x40] sm:$0xff]
    %v58 = vld [vmem:[#allocation5 + $0x48] sm:$0xff]
    %v59 = vld [vmem:[#allocation5 + $0x50] sm:$0xff]
    %v60 = vld [vmem:[#allocation5 + $0x58] sm:$0xff]
    %v61 = vld [vmem:[#allocation5 + $0x60] sm:$0xff]
    %v62 = vld [vmem:[#allocation5 + $0x68] sm:$0xff]
    %v63 = vld [vmem:[#allocation5 + $0x70] sm:$0xff]
    %v64 = vld [vmem:[#allocation5 + $0x78] sm:$0xff]
    %v65 = vld [vmem:[#allocation5 + $0x80] sm:$0xff]
    %v66 = vld [vmem:[#allocation5 + $0x88] sm:$0xff]
    %v67 = vld [vmem:[#allocation5 + $0x90] sm:$0xff]
    %v68 = vld [vmem:[#allocation5 + $0x98] sm:$0xff]
    %v69 = vld [vmem:[#allocation5 + $0xa0] sm:$0xff]
    %v70 = vld [vmem:[#allocation5 + $0xa8] sm:$0xff]
    %v71 = vld [vmem:[#allocation5 + $0xb0] sm:$0xff]
    %v72 = vld [vmem:[#allocation5 + $0xb8] sm:$0xff]
    %v73 = vld [vmem:[#allocation5 + $0xc0] sm:$0xff]
    %v74 = vld [vmem:[#allocation5 + $0xc8] sm:$0xff]
    %v75 = vld [vmem:[#allocation5 + $0xd0] sm:$0xff]
    %v76 = vld [vmem:[#allocation5 + $0xd8] sm:$0xff]
    %v77 = vld [vmem:[#allocation5 + $0xe0] sm:$0xff]
    %v78 = vld [vmem:[#allocation5 + $0xe8] sm:$0xff]
    %v79 = vld [vmem:[#allocation5 + $0xf0] sm:$0xff]
    %v80 = vld [vmem:[#allocation5 + $0xf8] sm:$0xff]
    %v81 = vld [vmem:[%s2] sm:$0x3]
    %v83 = vperm.slane %v81, 0
    %v84 = vperm.slane %v81, 1
    %87 = vmatpush.msra.mxu0 %v79
    %88 = vmatpush.msra.mxu0 %v77
    %89 = vmatpush.msra.mxu0 %v75
    %90 = vmatpush.msra.mxu0 %v73
    %91 = vmatpush.msra.mxu0 %v71
    %92 = vmatpush.msra.mxu0 %v69
    %93 = vmatpush.msra.mxu0 %v67
    %94 = vmatpush.msra.mxu0 %v65
    %95 = vmatpush.msra.mxu0 %v63
    %96 = vmatpush.msra.mxu0 %v61
    %97 = vmatpush.msra.mxu0 %v59
    %98 = vmatpush.msra.mxu0 %v57
    %99 = vmatpush.msra.mxu0 %v55
    %100 = vmatpush.msra.mxu0 %v53
    %101 = vmatpush.msra.mxu0 %v51
    %102 = vmatpush.msra.mxu0 %v49
    %103 = vmatmul.f32.gmra.mxu0 %v47
    %v104 = vpop.f32.mrf.mxu0
    %v105 = vadd.f32 %v83, %v104
    %106 = vmatmul.f32.gmra.mxu0 %v48
    %v107 = vpop.f32.mrf.mxu0
    %v108 = vadd.f32 %v83, %v107
    %109 = vdwg.mxu0
    %110 = vmatpush.msra.mxu0 %v80
    %111 = vmatpush.msra.mxu0 %v78
    %112 = vmatpush.msra.mxu0 %v76
    %113 = vmatpush.msra.mxu0 %v74
    %114 = vmatpush.msra.mxu0 %v72
    %115 = vmatpush.msra.mxu0 %v70
    %116 = vmatpush.msra.mxu0 %v68
    %117 = vmatpush.msra.mxu0 %v66
    %118 = vmatpush.msra.mxu0 %v64
    %119 = vmatpush.msra.mxu0 %v62
    %120 = vmatpush.msra.mxu0 %v60
    %121 = vmatpush.msra.mxu0 %v58
    %122 = vmatpush.msra.mxu0 %v56
    %123 = vmatpush.msra.mxu0 %v54
    %124 = vmatpush.msra.mxu0 %v52
    %125 = vmatpush.msra.mxu0 %v50
    %126 = vmatmul.f32.gmra.mxu0 %v47
    %v127 = vpop.f32.mrf.mxu0
    %v128 = vadd.f32 %v84, %v127
    %129 = vmatmul.f32.gmra.mxu0 %v48
    %v130 = vpop.f32.mrf.mxu0
    %v131 = vadd.f32 %v84, %v130
    %132 = vdwg.mxu0
    %133 = vst [vmem:[#allocation7] sm:$0xff] %v105
    %134 = vst [vmem:[#allocation7 + $0x8] sm:$0xff] %v128
    %135 = vst [vmem:[#allocation7 + $0x10] sm:$0xff] %v108
    %136 = vst [vmem:[#allocation7 + $0x18] sm:$0xff] %v131
    // Predicated region
    $region22: #{conv1d.1} parent=1 // pred_check
      _
    $region23: #{conv1d.1} parent=1 // pred_check_branch
      %138 = sbr.rel (0) target = $region25
    $region24: #{conv1d.1} parent=1 // pred_region
      %140 = vsyncadd [#allocation4], 0
      %s141 = sshll.u32 [#allocation7], 4
      %s142 = int_to_ptr.vmem [resolvable:$true] %s141
      %s143 = sshll.u32 %s3, 4
      %s144 = int_to_ptr.hbm [resolvable:$true] %s143
      %149 = dma.vmem_to_hbm [thread:$0]  %s142, 512, %s144, [#allocation4], 256, 256, 16
    $region25: #{conv1d.1} parent=1 // pred_fallthru
      _
    // Predicated region
    $region26: #{conv1d.1} parent=1 // pred_check
      _
    $region27: #{conv1d.1} parent=1 // pred_check_branch
      %151 = sbr.rel (0) target = $region29
    $region28: #{conv1d.1} parent=1 // pred_region
      %153 = dma.done [#allocation4], 512
    $region29: #{conv1d.1} parent=1 // pred_fallthru
      _
    %154 = vsyncpa [#allocation3], 1
    %155 = vsyncpa [#allocation6], 1
    %156 = vsyncpa [#allocation4], 1

</llo_original>
